<compile_context>
chip_gen: v6e
topology: v6e:2x2x1
jax: 0.10.0
libtpu: 0.0.40
codegen_flags: <defaults>
</compile_context>

<pallas_src>
import jax
import jax.numpy as jnp
from jax.experimental import pallas as pl
from jax.experimental.pallas import tpu as pltpu

_PACK = 8                  # batch rows packed per lane-dense row (8 * 16 = 128 lanes)
_MAX_PACKED_TILE = 2048    # packed rows per grid step (== 16384 batch rows, ~1 MiB/stream)
_SINGLE_TILE_ROWS = 128    # at or below this many packed rows, one full-array block wins
_TARGET_STEPS = 4          # aim for >= 4 grid steps (v7x megacore + pipeline overlap)


def _cdiv(a, b):
    return -(-a // b)


def _round_up(a, m):
    return _cdiv(a, m) * m


def _linear_leaky_kernel(xp_ref, wblk_ref, b_ref, out_ref, mask_ref):
    # xp_ref:   (tile_p, 128) f32  - 8 batch rows of x packed per row (lane-dense)
    # wblk_ref: (128, 128)    f32  - block_diag(weight.T) replicated 8x
    # b_ref:    (1, 128)      f32  - bias tiled 8x
    # out_ref:  (tile_p, 128) f32  - packed leaky-ReLU output (lane-dense store)
    # mask_ref: (tile_p, 128) i8   - packed (y > 0) mask (lane-dense store)
    # NOTE: Mosaic lowers the f32 dot at full f32 precision (verified against a
    # 1e-5 reference); the 16-deep contraction keeps this numerically trivial.
    y = jnp.dot(xp_ref[...], wblk_ref[...], preferred_element_type=jnp.float32)
    y = y + b_ref[...]
    pos = y > 0.0
    out_ref[...] = jnp.where(pos, y, y * 0.01)
    mask_ref[...] = pos.astype(jnp.int8)


@jax.jit
def linear_leaky_relu(x, weight, bias):
    """x: (B, 16) f32; weight: (16, 16) f32 (PyTorch (out, in)); bias: (16,) f32.

    Returns (out, mask) matching the PyTorch module's (t4, t2):
      out  f32  (B, 16) = leaky_relu(x @ W.T + b, slope=0.01)
      mask bool (B, 16) = (x @ W.T + b) > 0
    """
    B, IN = x.shape
    OUT = weight.shape[0]
    assert IN == 16 and OUT == 16, "packing scheme assumes 16x16 features"

    # --- parameter packing (tiny; constant-folded / fused by XLA under jit) ---
    w_block = jnp.kron(jnp.eye(_PACK, dtype=x.dtype), weight.T)     # (128, 128)
    b_tiled = jnp.tile(bias, _PACK).reshape(1, _PACK * OUT)         # (1, 128)

    # --- batch packing: 8 rows of 16 -> 1 lane-dense row of 128 ---
    packed_rows = _cdiv(B, _PACK)
    padded_b = packed_rows * _PACK
    if padded_b == B:
        # Contiguous reshape: no data movement, no extra HBM pass.
        x_packed = x.reshape(packed_rows, _PACK * IN)
    else:
        # Ragged batch: pad only the (< 8)-row tail.
        x_packed = jnp.pad(x, ((0, padded_b - B), (0, 0))).reshape(
            packed_rows, _PACK * IN)

    # --- tile / grid selection ---
    if packed_rows <= _SINGLE_TILE_ROWS:
        tile_p = packed_rows                 # small batch: one full-array block
    else:
        # >= _TARGET_STEPS steps; tile_p multiple of 32 so the int8 mask block
        # satisfies (32, 128) tiling. Pallas masks the last partial block.
        tile_p = min(_MAX_PACKED_TILE,
                     _round_up(_cdiv(packed_rows, _TARGET_STEPS), 32))
    grid = _cdiv(packed_rows, tile_p)

    lanes = _PACK * OUT  # 128
    flops = 2 * packed_rows * (_PACK * IN) * lanes
    bytes_accessed = (8 * packed_rows * lanes      # f32 x in + f32 out
                      + packed_rows * lanes        # int8 mask out
                      + 4 * (_PACK * IN) * lanes   # weight (once)
                      + 4 * lanes)                 # bias (once)

    out_packed, mask_packed = pl.pallas_call(
        _linear_leaky_kernel,
        out_shape=(
            jax.ShapeDtypeStruct((packed_rows, lanes), jnp.float32),
            jax.ShapeDtypeStruct((packed_rows, lanes), jnp.int8),
        ),
        grid=(grid,),
        in_specs=[
            pl.BlockSpec((tile_p, _PACK * IN), lambda i: (i, 0)),
            # Constant block index across the grid -> DMA'd once by the pipeline.
            pl.BlockSpec((_PACK * IN, lanes), lambda i: (0, 0)),
            pl.BlockSpec((1, lanes), lambda i: (0, 0)),
        ],
        out_specs=(
            pl.BlockSpec((tile_p, lanes), lambda i: (i, 0)),
            pl.BlockSpec((tile_p, lanes), lambda i: (i, 0)),
        ),
        compiler_params=pltpu.CompilerParams(
            dimension_semantics=("parallel",),
        ),
        cost_estimate=pl.CostEstimate(
            flops=flops, transcendentals=0, bytes_accessed=bytes_accessed),
    )(x_packed, w_block, b_tiled)

    out = out_packed.reshape(padded_b, OUT)
    mask_i8 = mask_packed.reshape(padded_b, OUT)
    if padded_b != B:
        out = out[:B]
        mask_i8 = mask_i8[:B]
    # int8 -> bool is a cheap 1 B/elem pass (kernel-side bool stores kept off
    # the critical path for lowering robustness).
    return out, mask_i8.astype(jnp.bool_)


if __name__ == "__main__":
    key = jax.random.PRNGKey(0)
    kx, kw, kb = jax.random.split(key, 3)

    IN, OUT = 16, 16
    # Deterministic "Linear(16, 16)" parameters (synthetic, not a checkpoint).
    bound = 1.0 / (IN ** 0.5)
    weight = jax.random.uniform(kw, (OUT, IN), jnp.float32, -bound, bound)
    bias = jax.random.uniform(kb, (OUT,), jnp.float32, -bound, bound)

    def reference(x):
        y = x @ weight.T + bias
        return jnp.where(y > 0, y, y * 0.01), y > 0

    # Cover all code paths: the module's original shape (B=1), an aligned small
    # batch (single tile), a ragged batch (pad path), and a batch large enough
    # for a multi-step grid with a partial last block.
    for B in (1, 64, 13, 1600):
        x = jax.random.normal(jax.random.fold_in(kx, B), (B, IN), jnp.float32)
        out, mask = linear_leaky_relu(x, weight, bias)
        jax.block_until_ready((out, mask))

        out_ref, mask_ref = reference(x)
        assert out.shape == (B, OUT) and mask.shape == (B, OUT)
        assert mask.dtype == jnp.bool_
        assert jnp.allclose(out, out_ref, atol=1e-5), f"output mismatch at B={B}"
        assert jnp.array_equal(mask, mask_ref), f"mask mismatch at B={B}"

    print("KERNEL_OK")
</pallas_src>

<mosaic_0001>
module attributes {stable_mosaic.version = 11 : i64} {
  func.func @_linear_leaky_kernel(%arg0: i32, %arg1: memref<1x128xf32, #tpu.memory_space<vmem>>, %arg2: memref<128x128xf32, #tpu.memory_space<vmem>>, %arg3: memref<1x128xf32, #tpu.memory_space<vmem>>, %arg4: memref<1x128xf32, #tpu.memory_space<vmem>>, %arg5: memref<1x128xi8, #tpu.memory_space<vmem>>) attributes {dimension_semantics = [#tpu.dimension_semantics<parallel>], iteration_bounds = array<i64: 1>, scalar_prefetch = 0 : i64, scratch_operands = 0 : i64, tpu.core_type = #tpu.core_type<tc>, window_params = [{transform_indices = @transform_0, window_bounds = array<i64: 1, 128>}, {pipeline_mode = #tpu.pipeline_mode<synchronous>, transform_indices = @transform_1, window_bounds = array<i64: 128, 128>}, {pipeline_mode = #tpu.pipeline_mode<synchronous>, transform_indices = @transform_2, window_bounds = array<i64: 1, 128>}, {transform_indices = @transform_3, window_bounds = array<i64: 1, 128>}, {transform_indices = @transform_4, window_bounds = array<i64: 1, 128>}]} {
    %c0 = arith.constant 0 : index
    %c0_0 = arith.constant 0 : index
    %0 = vector.load %arg1[%c0, %c0_0] : memref<1x128xf32, #tpu.memory_space<vmem>>, vector<1x128xf32>
    %c0_1 = arith.constant 0 : index
    %c0_2 = arith.constant 0 : index
    %1 = vector.load %arg2[%c0_1, %c0_2] : memref<128x128xf32, #tpu.memory_space<vmem>>, vector<128x128xf32>
    %cst = arith.constant dense<0.000000e+00> : vector<1x128xf32>
    %2 = tpu.matmul %0, %1, %cst {dimension_numbers = #tpu.dot_dimension_numbers<[1], [0], [0], [1], [0, 0, 1, 1], [], []>} : vector<1x128xf32>, vector<128x128xf32>, vector<1x128xf32> -> vector<1x128xf32>
    %c0_3 = arith.constant 0 : index
    %c0_4 = arith.constant 0 : index
    %3 = vector.load %arg3[%c0_3, %c0_4] : memref<1x128xf32, #tpu.memory_space<vmem>>, vector<1x128xf32>
    %4 = arith.addf %2, %3 : vector<1x128xf32>
    %cst_5 = arith.constant 0.000000e+00 : f32
    %5 = vector.broadcast %cst_5 : f32 to vector<1x128xf32>
    %6 = arith.cmpf ogt, %4, %5 : vector<1x128xf32>
    %cst_6 = arith.constant 0.00999999977 : f32
    %7 = vector.broadcast %cst_6 : f32 to vector<1x128xf32>
    %8 = arith.mulf %4, %7 : vector<1x128xf32>
    %9 = arith.select %6, %4, %8 : vector<1x128xi1>, vector<1x128xf32>
    %c0_7 = arith.constant 0 : index
    %c0_8 = arith.constant 0 : index
    %10 = vector.load %arg4[%c0_7, %c0_8] : memref<1x128xf32, #tpu.memory_space<vmem>>, vector<1x128xf32>
    tpu.vector_store %arg4[%c0_7, %c0_8], %9 {strides = array<i32>} : memref<1x128xf32, #tpu.memory_space<vmem>>, vector<1x128xf32>,
    %11 = arith.extui %6 : vector<1x128xi1> to vector<1x128xi8>
    %c0_9 = arith.constant 0 : index
    %c0_10 = arith.constant 0 : index
    %12 = vector.load %arg5[%c0_9, %c0_10] : memref<1x128xi8, #tpu.memory_space<vmem>>, vector<1x128xi8>
    tpu.vector_store %arg5[%c0_9, %c0_10], %11 {strides = array<i32>} : memref<1x128xi8, #tpu.memory_space<vmem>>, vector<1x128xi8>,
    return
  }
  func.func @transform_0(%arg0: i32) -> (i32, i32) {
    %c0_i32 = arith.constant 0 : i32
    %c0_i32_0 = arith.constant 0 : i32
    return %arg0, %c0_i32 : i32, i32
  }
  func.func @transform_1(%arg0: i32) -> (i32, i32) {
    %c0_i32 = arith.constant 0 : i32
    %c0_i32_0 = arith.constant 0 : i32
    %c0_i32_1 = arith.constant 0 : i32
    return %c0_i32, %c0_i32_0 : i32, i32
  }
  func.func @transform_2(%arg0: i32) -> (i32, i32) {
    %c0_i32 = arith.constant 0 : i32
    %c0_i32_0 = arith.constant 0 : i32
    %c0_i32_1 = arith.constant 0 : i32
    return %c0_i32, %c0_i32_0 : i32, i32
  }
  func.func @transform_3(%arg0: i32) -> (i32, i32) {
    %c0_i32 = arith.constant 0 : i32
    %c0_i32_0 = arith.constant 0 : i32
    return %arg0, %c0_i32 : i32, i32
  }
  func.func @transform_4(%arg0: i32) -> (i32, i32) {
    %c0_i32 = arith.constant 0 : i32
    %c0_i32_0 = arith.constant 0 : i32
    return %arg0, %c0_i32 : i32, i32
  }
}

</mosaic_0001>

<llo_original>
// kernel: tile.8
$region0: #{tile.8}
  #allocation0 [shape = 's32[1]{0}', space=sflag, size = 0x4, scoped, tag = 'scoped memory for tile.8']
  %s0 = inlined_call_operand.vmem [shape: f32[16], index: 0, kind: input, shape index: {}]
  %s1 = inlined_call_operand.vmem [shape: f32[8,16], index: 1, kind: output, shape index: {}]
  // Predicated region
  $region2: #{tile.8} parent=0 // pred_check
    _
  $region3: #{tile.8} parent=0 // pred_check_branch
    %3 = sbr.rel (0) target = $region5
  $region4: #{tile.8} parent=0 // pred_region
    _
  $region5: #{tile.8} parent=0 // pred_fallthru
    _
  %v4 = vld [vmem:[%s0] ss:$0 sm:$0xff]
  %5 = vst [vmem:[%s1] sm:$0xff] %v4

// kernel: linear_leaky_relu.1
$region0: #{linear_leaky_relu.1}
  #allocation0 [shape = 'u32[]', space=smem, size = 0x4, offset = 0x4, fixed_abs, tag = 'smem constant byte address 0x4 - core index']
  #allocation1 [shape = 'u32[144,128]{1,0:T(1,128)}', space=vmem, size = 0x12000, scoped, tag = 'internal scratch']
  %s0 = inlined_call_operand.vmem [shape: f32[1,128], index: 0, kind: input, shape index: {}]
  %s1 = inlined_call_operand.vmem [shape: f32[128,128], index: 1, kind: input, shape index: {}]
  %s2 = inlined_call_operand.vmem [shape: f32[1,128], index: 2, kind: input, shape index: {}]
  %s3 = inlined_call_operand.hbm [shape: f32[1,128], index: 3, kind: output, shape index: {0}]
  %s4 = inlined_call_operand.vmem [shape: s8[1,128], index: 4, kind: output, shape index: {1}]
  %5 = xla_tuple %s3, %s4
  %s6 = sld [smem:[#allocation0]]
  $region30: #{linear_leaky_relu.1} parent=0
    _
  %s8 = ssub.s32 1, %s6
  %s9 = scalar_select 0, %s8, %s6
  $region1: #{linear_leaky_relu.1} parent=0
    #allocation2 [shape = 'u8[512]{0}', space=vmem, size = 0x400, scoped, tag = 'output window, operand 0, single buffered']
    #allocation3 [shape = 's32[1]{0}', space=sflag, size = 0x4, scoped, tag = 'scoped memory for linear_leaky_relu.1']
    %10 = vsyncpa [#allocation3], 0
    // Predicated region
    $region2: #{linear_leaky_relu.1} parent=1 // pred_check
      _
    $region3: #{linear_leaky_relu.1} parent=1 // pred_check_branch
      %12 = sbr.rel (0) target = $region5
    $region4: #{linear_leaky_relu.1} parent=1 // pred_region
      _
    $region5: #{linear_leaky_relu.1} parent=1 // pred_fallthru
      _
    // Predicated region
    $region6: #{linear_leaky_relu.1} parent=1 // pred_check
      _
    $region7: #{linear_leaky_relu.1} parent=1 // pred_check_branch
      %14 = sbr.rel (0) target = $region9
    $region8: #{linear_leaky_relu.1} parent=1 // pred_region
      _
    $region9: #{linear_leaky_relu.1} parent=1 // pred_fallthru
      _
    // Predicated region
    $region10: #{linear_leaky_relu.1} parent=1 // pred_check
      _
    $region11: #{linear_leaky_relu.1} parent=1 // pred_check_branch
      %16 = sbr.rel (0) target = $region13
    $region12: #{linear_leaky_relu.1} parent=1 // pred_region
      _
    $region13: #{linear_leaky_relu.1} parent=1 // pred_fallthru
      _
    %v19 = vld [vmem:[%s0] sm:$0x1]
    %v20 = vld [vmem:[%s1] sm:$0xff]
    %v21 = vld [vmem:[%s1 + $0x8] sm:$0xff]
    %v22 = vld [vmem:[%s1 + $0x10] sm:$0xff]
    %v23 = vld [vmem:[%s1 + $0x18] sm:$0xff]
    %v24 = vld [vmem:[%s1 + $0x20] sm:$0xff]
    %v25 = vld [vmem:[%s1 + $0x28] sm:$0xff]
    %v26 = vld [vmem:[%s1 + $0x30] sm:$0xff]
    %v27 = vld [vmem:[%s1 + $0x38] sm:$0xff]
    %v28 = vld [vmem:[%s1 + $0x40] sm:$0xff]
    %v29 = vld [vmem:[%s1 + $0x48] sm:$0xff]
    %v30 = vld [vmem:[%s1 + $0x50] sm:$0xff]
    %v31 = vld [vmem:[%s1 + $0x58] sm:$0xff]
    %v32 = vld [vmem:[%s1 + $0x60] sm:$0xff]
    %v33 = vld [vmem:[%s1 + $0x68] sm:$0xff]
    %v34 = vld [vmem:[%s1 + $0x70] sm:$0xff]
    %v35 = vld [vmem:[%s1 + $0x78] sm:$0xff]
    %v36 = vld [vmem:[%s2] sm:$0x1]
    %37 = vmatprep.subr.mxu0 0.0
    %38 = vmatpush1.msra.mxu0 %v35
    %39 = vmatprep.subr.mxu0 0.0
    %40 = vmatpush1.msra.mxu0 %v34
    %41 = vmatprep.subr.mxu0 0.0
    %42 = vmatpush1.msra.mxu0 %v33
    %43 = vmatprep.subr.mxu0 0.0
    %44 = vmatpush1.msra.mxu0 %v32
    %45 = vmatprep.subr.mxu0 0.0
    %46 = vmatpush1.msra.mxu0 %v31
    %47 = vmatprep.subr.mxu0 0.0
    %48 = vmatpush1.msra.mxu0 %v30
    %49 = vmatprep.subr.mxu0 0.0
    %50 = vmatpush1.msra.mxu0 %v29
    %51 = vmatprep.subr.mxu0 0.0
    %52 = vmatpush1.msra.mxu0 %v28
    %53 = vmatprep.subr.mxu0 0.0
    %54 = vmatpush1.msra.mxu0 %v27
    %55 = vmatprep.subr.mxu0 0.0
    %56 = vmatpush1.msra.mxu0 %v26
    %57 = vmatprep.subr.mxu0 0.0
    %58 = vmatpush1.msra.mxu0 %v25
    %59 = vmatprep.subr.mxu0 0.0
    %60 = vmatpush1.msra.mxu0 %v24
    %61 = vmatprep.subr.mxu0 0.0
    %62 = vmatpush1.msra.mxu0 %v23
    %63 = vmatprep.subr.mxu0 0.0
    %64 = vmatpush1.msra.mxu0 %v22
    %65 = vmatprep.subr.mxu0 0.0
    %66 = vmatpush1.msra.mxu0 %v21
    %67 = vmatprep.subr.mxu0 0.0
    %68 = vmatpush1.msra.mxu0 %v20
    %69 = vmatprep.subr.mxu0 0.0
    %70 = vmatpush2.msra.mxu0 0.0
    %71 = vmatprep.subr.mxu0 0.0
    %72 = vmatpush2.msra.mxu0 0.0
    %73 = vmatprep.subr.mxu0 0.0
    %74 = vmatpush2.msra.mxu0 0.0
    %75 = vmatprep.subr.mxu0 0.0
    %76 = vmatpush2.msra.mxu0 0.0
    %77 = vmatprep.subr.mxu0 0.0
    %78 = vmatpush2.msra.mxu0 0.0
    %79 = vmatprep.subr.mxu0 0.0
    %80 = vmatpush2.msra.mxu0 0.0
    %81 = vmatprep.subr.mxu0 0.0
    %82 = vmatpush2.msra.mxu0 0.0
    %83 = vmatprep.subr.mxu0 0.0
    %84 = vmatpush2.msra.mxu0 0.0
    %85 = vmatprep.subr.mxu0 0.0
    %86 = vmatpush2.msra.mxu0 0.0
    %87 = vmatprep.subr.mxu0 0.0
    %88 = vmatpush2.msra.mxu0 0.0
    %89 = vmatprep.subr.mxu0 0.0
    %90 = vmatpush2.msra.mxu0 0.0
    %91 = vmatprep.subr.mxu0 0.0
    %92 = vmatpush2.msra.mxu0 0.0
    %93 = vmatprep.subr.mxu0 0.0
    %94 = vmatpush2.msra.mxu0 0.0
    %95 = vmatprep.subr.mxu0 0.0
    %96 = vmatpush2.msra.mxu0 0.0
    %97 = vmatprep.subr.mxu0 0.0
    %98 = vmatpush2.msra.mxu0 0.0
    %99 = vmatprep.subr.mxu0 0.0
    %100 = vmatpush2.msra.mxu0 0.0
    %101 = vmatprep.mubr.f32.mxu0 0.0
    %102 = vmatmul.mubr.f32.gmra.mxu0 %v19
    %v103 = vpop.f32.mrf.mxu0
    %v104 = vadd.f32 %v36, %v103
    %v105 = vpop.f32.mrf.mxu0
    %106 = vdwg.mxu0
    %vm107 = vcmp.gt.f32.partialorder %v104, 0.0
    %v108 = vmul.f32 %v104, 0.01
    %v109 = vsel %vm107, %v104, %v108
    %110 = vst [vmem:[#allocation2] sm:$0x1] %v109
    %vm111 = vmpackc.low %vm107, %vm107
    %vm112 = vmpackc.even %vm111, %vm111
    %v113 = vsel %vm112, 16843009, 0
    %vm114 = vcmask 1040384
    %vm115 = vsmask.f32 0
    %vm116 = vmand %vm114, %vm115
    %v117 = vld [vmem:[%s4] sm:$0x1]
    %v118 = vsel %vm116, %v113, %v117
    %119 = vst [vmem:[%s4] sm:$0x1] %v118
    // Predicated region
    $region14: #{linear_leaky_relu.1} parent=1 // pred_check
      _
    $region15: #{linear_leaky_relu.1} parent=1 // pred_check_branch
      %121 = sbr.rel (0) target = $region17
    $region16: #{linear_leaky_relu.1} parent=1 // pred_region
      %s123 = ssub.s32 16, 16
      %124 = vsyncadd [#allocation3], %s123
      %s126 = sshll.u32 [#allocation2], 4
      %s127 = int_to_ptr.vmem [resolvable:$true] %s126
      %129 = dma.vmem_to_hbm [thread:$0]  %s127, 16, %s3, [#allocation3]
    $region17: #{linear_leaky_relu.1} parent=1 // pred_fallthru
      _
    // Predicated region
    $region18: #{linear_leaky_relu.1} parent=1 // pred_check
      _
    $region19: #{linear_leaky_relu.1} parent=1 // pred_check_branch
      %131 = sbr.rel (0) target = $region21
    $region20: #{linear_leaky_relu.1} parent=1 // pred_region
      _
    $region21: #{linear_leaky_relu.1} parent=1 // pred_fallthru
      _
    // Predicated region
    $region22: #{linear_leaky_relu.1} parent=1 // pred_check
      _
    $region23: #{linear_leaky_relu.1} parent=1 // pred_check_branch
      %133 = sbr.rel (0) target = $region25
    $region24: #{linear_leaky_relu.1} parent=1 // pred_region
      %134 = dma.done [#allocation3], 16
    $region25: #{linear_leaky_relu.1} parent=1 // pred_fallthru
      _
    // Predicated region
    $region26: #{linear_leaky_relu.1} parent=1 // pred_check
      _
    $region27: #{linear_leaky_relu.1} parent=1 // pred_check_branch
      %136 = sbr.rel (0) target = $region29
    $region28: #{linear_leaky_relu.1} parent=1 // pred_region
      _
    $region29: #{linear_leaky_relu.1} parent=1 // pred_fallthru
      _
    %137 = vsyncpa [#allocation3], 1

</llo_original>
